<compile_context>
chip_gen: v5e
topology: v5e:2x2
jax: 0.10.0
libtpu: 0.0.40
codegen_flags: <defaults>
</compile_context>

<pallas_src>
import functools

import jax
import jax.numpy as jnp
from jax.experimental import pallas as pl
from jax.experimental.pallas import tpu as pltpu

TAU = 2.0
V_TH = 1.0
V_RESET = 0.0


def _round_up(x, m):
    return ((x + m - 1) // m) * m


def _cdiv(a, b):
    return (a + b - 1) // b


def _vmem_capacity_bytes():
    """Physical VMEM per TensorCore; conservative fallback if query fails."""
    try:
        info = pltpu.get_tpu_info()
        cap = getattr(info, "vmem_capacity_bytes", None)
        if cap:
            return int(cap)
    except Exception:
        pass
    return 64 * 1024 * 1024  # v7x per-TC size (safe lower bound)


def _decoder_kernel(x_ref, w_ref, b_ref, o_ref, v_ref, *, matmul_dtype):
    """One grid step == (token tile m, time block tb).  Time blocks are the
    innermost, sequential ('arbitrary') axis; v_ref (VMEM scratch) carries the
    membrane potential across time for the current token tile."""
    tb = pl.program_id(1)

    @pl.when(tb == 0)
    def _():
        v_ref[...] = jnp.full_like(v_ref, V_RESET)

    w = w_ref[...].astype(matmul_dtype)   # (D, C), resident
    b = b_ref[...]                        # (1, C)

    # Unrolled loop over the Tt time steps held in this block (Tt is small).
    for tl in range(x_ref.shape[0]):
        x = x_ref[tl].astype(jnp.float32)              # (TM, D)
        v = v_ref[...]
        # LIF charge (decay_input=True, v_reset=0): H = V + (X - V) / tau
        h = v + (x - v) * (1.0 / TAU)
        fired = h >= V_TH
        spike = fired.astype(jnp.float32)
        v_ref[...] = jnp.where(fired, V_RESET, h)      # fused hard reset

        # Linear head on the MXU: y = spike @ W + b  (spike cast is exact)
        y = jnp.dot(spike.astype(matmul_dtype), w,
                    preferred_element_type=jnp.float32)
        o_ref[tl] = (y + b).astype(o_ref.dtype)


def decoder_forward(x, w, b, *, matmul_dtype=jnp.float32,
                    max_rows_per_tile=None, max_time_steps=None):
    """x: [T, B, N, D]; w: [D, C] (transpose of PyTorch [C, D]); b: [C].
    Returns [T, B, N, C] float32."""
    T, B, N, D = x.shape
    Dw, C = w.shape
    assert Dw == D and b.shape == (C,)
    M = B * N

    x2 = x.reshape(T, M, D)      # free reshape, no copy
    b2 = b.reshape(1, C)
    in_bytes = x.dtype.itemsize

    # --- per-generation VMEM budget -------------------------------------
    phys = _vmem_capacity_bytes()
    if phys >= 100 * 1024 * 1024:            # v5e / v6e (128 MiB physical)
        budget = 96 * 1024 * 1024
        vmem_limit = 100 * 1024 * 1024
    else:                                    # v7x (64 MiB per TensorCore)
        budget = 40 * 1024 * 1024
        vmem_limit = 44 * 1024 * 1024
    vmem_limit = min(vmem_limit, phys)

    # --- token tile TM ----------------------------------------------------
    fixed = 2 * (D * C * 4 + C * 4)                    # W + bias (double-buffered)
    per_row = 2 * (D * in_bytes + C * 4) + D * 4       # x-in + y-out (2 bufs) + V scratch
    tm = max(8, min(2048, (budget - fixed) // per_row))
    tm = (tm // 8) * 8
    # Keep >=2 token tiles for megacore (v7x) when each half would still be >=256 rows.
    half = _round_up(_cdiv(M, 2), 8)
    if half >= 256:
        tm = min(tm, half)
    if max_rows_per_tile is not None:
        tm = min(tm, max(8, _round_up(max_rows_per_tile, 8)))
    if tm >= M:
        tm = M                   # full-extent block: always layout-legal
    grid_m = _cdiv(M, tm)

    # --- time block Tt (amortize per-grid-step overhead for small tiles) --
    rem = budget - fixed - tm * D * 4
    per_t = 2 * tm * (D * in_bytes + C * 4)
    tt_fit = max(1, rem // max(1, per_t))
    tt_target = max(1, _cdiv(2 * 1024 * 1024, max(1, tm * D * in_bytes)))
    tt = min(T, tt_fit, tt_target, 8)
    if max_time_steps is not None:
        tt = min(tt, max_time_steps)
    tt = int(max(1, tt))
    grid_t = _cdiv(T, tt)

    kernel = functools.partial(_decoder_kernel, matmul_dtype=matmul_dtype)

    out = pl.pallas_call(
        kernel,
        out_shape=jax.ShapeDtypeStruct((T, M, C), jnp.float32),
        grid_spec=pltpu.PrefetchScalarGridSpec(
            num_scalar_prefetch=0,
            grid=(grid_m, grid_t),               # token tiles outer, time inner
            in_specs=[
                # x[t-block, m-tile] -> kernel ref (tt, TM, D)
                pl.BlockSpec((tt, tm, D), lambda m, t: (t, m, 0)),
                # weight / bias resident across the whole grid
                pl.BlockSpec((D, C), lambda m, t: (0, 0)),
                pl.BlockSpec((1, C), lambda m, t: (0, 0)),
            ],
            out_specs=pl.BlockSpec((tt, tm, C), lambda m, t: (t, m, 0)),
            scratch_shapes=[pltpu.VMEM((tm, D), jnp.float32)],  # membrane potential
        ),
        compiler_params=pltpu.CompilerParams(
            # token tiles independent (megacore), time sequential (carries V)
            dimension_semantics=("parallel", "arbitrary"),
            vmem_limit_bytes=int(vmem_limit),
        ),
    )(x2, w, b2)

    return out.reshape(T, B, N, C)


def decoder_reference(x, w, b):
    """Pure-JAX reference of the same forward pass."""
    def step(v, xt):
        h = v + (xt - v) / TAU
        spike = (h >= V_TH).astype(jnp.float32)
        v_new = jnp.where(h >= V_TH, V_RESET, h)
        return v_new, spike

    v0 = jnp.full(x.shape[1:], V_RESET, jnp.float32)
    _, spikes = jax.lax.scan(step, v0, x.astype(jnp.float32))
    return jnp.einsum("tbnd,dc->tbnc", spikes, w) + b


if __name__ == "__main__":
    key = jax.random.PRNGKey(0)

    def run_case(T, B, N, D, C, key, **kw):
        kx, kw_, kb = jax.random.split(key, 3)
        x = jax.random.normal(kx, (T, B, N, D), dtype=jnp.float32) * 1.5
        # Deterministic PyTorch-style Linear init: U(-1/sqrt(D), 1/sqrt(D))
        bound = 1.0 / (D ** 0.5)
        w = jax.random.uniform(kw_, (D, C), minval=-bound, maxval=bound,
                               dtype=jnp.float32)
        b = jax.random.uniform(kb, (C,), minval=-bound, maxval=bound,
                               dtype=jnp.float32)

        y = decoder_forward(x, w, b, **kw)
        y = jax.block_until_ready(y)
        y_ref = decoder_reference(x, w, b)
        assert y.shape == (T, B, N, C)
        assert jnp.allclose(y, y_ref, atol=1e-5, rtol=1e-5), "mismatch vs reference"

    k0, k1, k2 = jax.random.split(key, 3)
    # Main small case: T=4, B=2, N=8 tokens, embed_dims=32, num_classes=16
    run_case(T=4, B=2, N=8, D=32, C=16, key=k0)
    # Ragged dims (M=5, C=10, D=48): full-extent blocks, unpadded class dim.
    run_case(T=3, B=1, N=5, D=48, C=10, key=k1)
    # Forced small tiles: exercises partial edge blocks on both M and T
    # (M=40 with TM=16, T=5 with Tt=2) -> validates the no-padding path.
    run_case(T=5, B=5, N=8, D=32, C=10, key=k2,
             max_rows_per_tile=16, max_time_steps=2)

    print("KERNEL_OK")
</pallas_src>

<mosaic_0001>
module attributes {stable_mosaic.version = 11 : i64} {
  func.func @_decoder_kernel(%arg0: i32, %arg1: i32, %arg2: memref<4x16x32xf32, #tpu.memory_space<vmem>>, %arg3: memref<32x16xf32, #tpu.memory_space<vmem>>, %arg4: memref<1x16xf32, #tpu.memory_space<vmem>>, %arg5: memref<4x16x16xf32, #tpu.memory_space<vmem>>, %arg6: memref<16x32xf32, #tpu.memory_space<vmem>>) attributes {dimension_semantics = [#tpu.dimension_semantics<parallel>, #tpu.dimension_semantics<arbitrary>], iteration_bounds = array<i64: 1, 1>, scalar_prefetch = 0 : i64, scratch_operands = 1 : i64, tpu.core_type = #tpu.core_type<tc>, window_params = [{transform_indices = @transform_0, window_bounds = array<i64: 4, 16, 32>}, {pipeline_mode = #tpu.pipeline_mode<synchronous>, transform_indices = @transform_1, window_bounds = array<i64: 32, 16>}, {pipeline_mode = #tpu.pipeline_mode<synchronous>, transform_indices = @transform_2, window_bounds = array<i64: 1, 16>}, {transform_indices = @transform_3, window_bounds = array<i64: 4, 16, 16>}]} {
    %c0_i32 = arith.constant 0 : i32
    %0 = arith.cmpi eq, %arg1, %c0_i32 : i32
    %1 = arith.extui %0 : i1 to i32
    %c0_i32_0 = arith.constant 0 : i32
    %2 = arith.cmpi ne, %1, %c0_i32_0 : i32
    scf.if %2 {
      %cst_56 = arith.constant 0.000000e+00 : f32
      %85 = vector.broadcast %cst_56 : f32 to vector<16x32xf32>
      %c0_57 = arith.constant 0 : index
      %c0_58 = arith.constant 0 : index
      %86 = vector.load %arg6[%c0_57, %c0_58] : memref<16x32xf32, #tpu.memory_space<vmem>>, vector<16x32xf32>
      tpu.vector_store %arg6[%c0_57, %c0_58], %85 {strides = array<i32>} : memref<16x32xf32, #tpu.memory_space<vmem>>, vector<16x32xf32>,
    } else {
    }
    %c0 = arith.constant 0 : index
    %c0_1 = arith.constant 0 : index
    %3 = vector.load %arg3[%c0, %c0_1] : memref<32x16xf32, #tpu.memory_space<vmem>>, vector<32x16xf32>
    %c0_2 = arith.constant 0 : index
    %c0_3 = arith.constant 0 : index
    %4 = vector.load %arg4[%c0_2, %c0_3] : memref<1x16xf32, #tpu.memory_space<vmem>>, vector<1x16xf32>
    %c0_4 = arith.constant 0 : index
    %c0_5 = arith.constant 0 : index
    %c0_6 = arith.constant 0 : index
    %5 = vector.load %arg2[%c0_4, %c0_5, %c0_6] : memref<4x16x32xf32, #tpu.memory_space<vmem>>, vector<1x16x32xf32>
    %6 = vector.shape_cast %5 : vector<1x16x32xf32> to vector<16x32xf32>
    %c0_7 = arith.constant 0 : index
    %c0_8 = arith.constant 0 : index
    %7 = vector.load %arg6[%c0_7, %c0_8] : memref<16x32xf32, #tpu.memory_space<vmem>>, vector<16x32xf32>
    %8 = arith.subf %6, %7 : vector<16x32xf32>
    %cst = arith.constant 5.000000e-01 : f32
    %9 = vector.broadcast %cst : f32 to vector<16x32xf32>
    %10 = arith.mulf %8, %9 : vector<16x32xf32>
    %11 = arith.addf %7, %10 : vector<16x32xf32>
    %cst_9 = arith.constant 1.000000e+00 : f32
    %12 = vector.broadcast %cst_9 : f32 to vector<16x32xf32>
    %13 = arith.cmpf oge, %11, %12 : vector<16x32xf32>
    %14 = arith.extui %13 : vector<16x32xi1> to vector<16x32xi32>
    %15 = arith.sitofp %14 : vector<16x32xi32> to vector<16x32xf32>
    %cst_10 = arith.constant 0.000000e+00 : f32
    %16 = vector.broadcast %cst_10 : f32 to vector<16x32xf32>
    %17 = arith.select %13, %16, %11 : vector<16x32xi1>, vector<16x32xf32>
    %c0_11 = arith.constant 0 : index
    %c0_12 = arith.constant 0 : index
    %18 = vector.load %arg6[%c0_11, %c0_12] : memref<16x32xf32, #tpu.memory_space<vmem>>, vector<16x32xf32>
    tpu.vector_store %arg6[%c0_11, %c0_12], %17 {strides = array<i32>} : memref<16x32xf32, #tpu.memory_space<vmem>>, vector<16x32xf32>,
    %cst_13 = arith.constant dense<0.000000e+00> : vector<16x16xf32>
    %19 = tpu.matmul %15, %3, %cst_13 {dimension_numbers = #tpu.dot_dimension_numbers<[1], [0], [0], [1], [0, 0, 1, 1], [], []>} : vector<16x32xf32>, vector<32x16xf32>, vector<16x16xf32> -> vector<16x16xf32>
    %20 = vector.broadcast %4 : vector<1x16xf32> to vector<16x16xf32>
    %21 = arith.addf %19, %20 : vector<16x16xf32>
    %c0_14 = arith.constant 0 : index
    %c0_15 = arith.constant 0 : index
    %c0_16 = arith.constant 0 : index
    %22 = vector.load %arg5[%c0_14, %c0_15, %c0_16] : memref<4x16x16xf32, #tpu.memory_space<vmem>>, vector<1x16x16xf32>
    %23 = vector.shape_cast %22 : vector<1x16x16xf32> to vector<16x16xf32>
    %24 = vector.shape_cast %21 : vector<16x16xf32> to vector<1x16x16xf32>
    tpu.vector_store %arg5[%c0_14, %c0_15, %c0_16], %24 {strides = array<i32>} : memref<4x16x16xf32, #tpu.memory_space<vmem>>, vector<1x16x16xf32>,
    %c1 = arith.constant 1 : index
    %c0_17 = arith.constant 0 : index
    %c0_18 = arith.constant 0 : index
    %25 = vector.load %arg2[%c1, %c0_17, %c0_18] : memref<4x16x32xf32, #tpu.memory_space<vmem>>, vector<1x16x32xf32>
    %26 = vector.shape_cast %25 : vector<1x16x32xf32> to vector<16x32xf32>
    %c0_19 = arith.constant 0 : index
    %c0_20 = arith.constant 0 : index
    %27 = vector.load %arg6[%c0_19, %c0_20] : memref<16x32xf32, #tpu.memory_space<vmem>>, vector<16x32xf32>
    %28 = arith.subf %26, %27 : vector<16x32xf32>
    %cst_21 = arith.constant 5.000000e-01 : f32
    %29 = vector.broadcast %cst_21 : f32 to vector<16x32xf32>
    %30 = arith.mulf %28, %29 : vector<16x32xf32>
    %31 = arith.addf %27, %30 : vector<16x32xf32>
    %cst_22 = arith.constant 1.000000e+00 : f32
    %32 = vector.broadcast %cst_22 : f32 to vector<16x32xf32>
    %33 = arith.cmpf oge, %31, %32 : vector<16x32xf32>
    %34 = arith.extui %33 : vector<16x32xi1> to vector<16x32xi32>
    %35 = arith.sitofp %34 : vector<16x32xi32> to vector<16x32xf32>
    %cst_23 = arith.constant 0.000000e+00 : f32
    %36 = vector.broadcast %cst_23 : f32 to vector<16x32xf32>
    %37 = arith.select %33, %36, %31 : vector<16x32xi1>, vector<16x32xf32>
    %c0_24 = arith.constant 0 : index
    %c0_25 = arith.constant 0 : index
    %38 = vector.load %arg6[%c0_24, %c0_25] : memref<16x32xf32, #tpu.memory_space<vmem>>, vector<16x32xf32>
    tpu.vector_store %arg6[%c0_24, %c0_25], %37 {strides = array<i32>} : memref<16x32xf32, #tpu.memory_space<vmem>>, vector<16x32xf32>,
    %cst_26 = arith.constant dense<0.000000e+00> : vector<16x16xf32>
    %39 = tpu.matmul %35, %3, %cst_26 {dimension_numbers = #tpu.dot_dimension_numbers<[1], [0], [0], [1], [0, 0, 1, 1], [], []>} : vector<16x32xf32>, vector<32x16xf32>, vector<16x16xf32> -> vector<16x16xf32>
    %40 = vector.broadcast %4 : vector<1x16xf32> to vector<16x16xf32>
    %41 = arith.addf %39, %40 : vector<16x16xf32>
    %c1_27 = arith.constant 1 : index
    %c0_28 = arith.constant 0 : index
    %c0_29 = arith.constant 0 : index
    %42 = vector.load %arg5[%c1_27, %c0_28, %c0_29] : memref<4x16x16xf32, #tpu.memory_space<vmem>>, vector<1x16x16xf32>
    %43 = vector.shape_cast %42 : vector<1x16x16xf32> to vector<16x16xf32>
    %44 = vector.shape_cast %41 : vector<16x16xf32> to vector<1x16x16xf32>
    tpu.vector_store %arg5[%c1_27, %c0_28, %c0_29], %44 {strides = array<i32>} : memref<4x16x16xf32, #tpu.memory_space<vmem>>, vector<1x16x16xf32>,
    %c2 = arith.constant 2 : index
    %c0_30 = arith.constant 0 : index
    %c0_31 = arith.constant 0 : index
    %45 = vector.load %arg2[%c2, %c0_30, %c0_31] : memref<4x16x32xf32, #tpu.memory_space<vmem>>, vector<1x16x32xf32>
    %46 = vector.shape_cast %45 : vector<1x16x32xf32> to vector<16x32xf32>
    %c0_32 = arith.constant 0 : index
    %c0_33 = arith.constant 0 : index
    %47 = vector.load %arg6[%c0_32, %c0_33] : memref<16x32xf32, #tpu.memory_space<vmem>>, vector<16x32xf32>
    %48 = arith.subf %46, %47 : vector<16x32xf32>
    %cst_34 = arith.constant 5.000000e-01 : f32
    %49 = vector.broadcast %cst_34 : f32 to vector<16x32xf32>
    %50 = arith.mulf %48, %49 : vector<16x32xf32>
    %51 = arith.addf %47, %50 : vector<16x32xf32>
    %cst_35 = arith.constant 1.000000e+00 : f32
    %52 = vector.broadcast %cst_35 : f32 to vector<16x32xf32>
    %53 = arith.cmpf oge, %51, %52 : vector<16x32xf32>
    %54 = arith.extui %53 : vector<16x32xi1> to vector<16x32xi32>
    %55 = arith.sitofp %54 : vector<16x32xi32> to vector<16x32xf32>
    %cst_36 = arith.constant 0.000000e+00 : f32
    %56 = vector.broadcast %cst_36 : f32 to vector<16x32xf32>
    %57 = arith.select %53, %56, %51 : vector<16x32xi1>, vector<16x32xf32>
    %c0_37 = arith.constant 0 : index
    %c0_38 = arith.constant 0 : index
    %58 = vector.load %arg6[%c0_37, %c0_38] : memref<16x32xf32, #tpu.memory_space<vmem>>, vector<16x32xf32>
    tpu.vector_store %arg6[%c0_37, %c0_38], %57 {strides = array<i32>} : memref<16x32xf32, #tpu.memory_space<vmem>>, vector<16x32xf32>,
    %cst_39 = arith.constant dense<0.000000e+00> : vector<16x16xf32>
    %59 = tpu.matmul %55, %3, %cst_39 {dimension_numbers = #tpu.dot_dimension_numbers<[1], [0], [0], [1], [0, 0, 1, 1], [], []>} : vector<16x32xf32>, vector<32x16xf32>, vector<16x16xf32> -> vector<16x16xf32>
    %60 = vector.broadcast %4 : vector<1x16xf32> to vector<16x16xf32>
    %61 = arith.addf %59, %60 : vector<16x16xf32>
    %c2_40 = arith.constant 2 : index
    %c0_41 = arith.constant 0 : index
    %c0_42 = arith.constant 0 : index
    %62 = vector.load %arg5[%c2_40, %c0_41, %c0_42] : memref<4x16x16xf32, #tpu.memory_space<vmem>>, vector<1x16x16xf32>
    %63 = vector.shape_cast %62 : vector<1x16x16xf32> to vector<16x16xf32>
    %64 = vector.shape_cast %61 : vector<16x16xf32> to vector<1x16x16xf32>
    tpu.vector_store %arg5[%c2_40, %c0_41, %c0_42], %64 {strides = array<i32>} : memref<4x16x16xf32, #tpu.memory_space<vmem>>, vector<1x16x16xf32>,
    %c3 = arith.constant 3 : index
    %c0_43 = arith.constant 0 : index
    %c0_44 = arith.constant 0 : index
    %65 = vector.load %arg2[%c3, %c0_43, %c0_44] : memref<4x16x32xf32, #tpu.memory_space<vmem>>, vector<1x16x32xf32>
    %66 = vector.shape_cast %65 : vector<1x16x32xf32> to vector<16x32xf32>
    %c0_45 = arith.constant 0 : index
    %c0_46 = arith.constant 0 : index
    %67 = vector.load %arg6[%c0_45, %c0_46] : memref<16x32xf32, #tpu.memory_space<vmem>>, vector<16x32xf32>
    %68 = arith.subf %66, %67 : vector<16x32xf32>
    %cst_47 = arith.constant 5.000000e-01 : f32
    %69 = vector.broadcast %cst_47 : f32 to vector<16x32xf32>
    %70 = arith.mulf %68, %69 : vector<16x32xf32>
    %71 = arith.addf %67, %70 : vector<16x32xf32>
    %cst_48 = arith.constant 1.000000e+00 : f32
    %72 = vector.broadcast %cst_48 : f32 to vector<16x32xf32>
    %73 = arith.cmpf oge, %71, %72 : vector<16x32xf32>
    %74 = arith.extui %73 : vector<16x32xi1> to vector<16x32xi32>
    %75 = arith.sitofp %74 : vector<16x32xi32> to vector<16x32xf32>
    %cst_49 = arith.constant 0.000000e+00 : f32
    %76 = vector.broadcast %cst_49 : f32 to vector<16x32xf32>
    %77 = arith.select %73, %76, %71 : vector<16x32xi1>, vector<16x32xf32>
    %c0_50 = arith.constant 0 : index
    %c0_51 = arith.constant 0 : index
    %78 = vector.load %arg6[%c0_50, %c0_51] : memref<16x32xf32, #tpu.memory_space<vmem>>, vector<16x32xf32>
    tpu.vector_store %arg6[%c0_50, %c0_51], %77 {strides = array<i32>} : memref<16x32xf32, #tpu.memory_space<vmem>>, vector<16x32xf32>,
    %cst_52 = arith.constant dense<0.000000e+00> : vector<16x16xf32>
    %79 = tpu.matmul %75, %3, %cst_52 {dimension_numbers = #tpu.dot_dimension_numbers<[1], [0], [0], [1], [0, 0, 1, 1], [], []>} : vector<16x32xf32>, vector<32x16xf32>, vector<16x16xf32> -> vector<16x16xf32>
    %80 = vector.broadcast %4 : vector<1x16xf32> to vector<16x16xf32>
    %81 = arith.addf %79, %80 : vector<16x16xf32>
    %c3_53 = arith.constant 3 : index
    %c0_54 = arith.constant 0 : index
    %c0_55 = arith.constant 0 : index
    %82 = vector.load %arg5[%c3_53, %c0_54, %c0_55] : memref<4x16x16xf32, #tpu.memory_space<vmem>>, vector<1x16x16xf32>
    %83 = vector.shape_cast %82 : vector<1x16x16xf32> to vector<16x16xf32>
    %84 = vector.shape_cast %81 : vector<16x16xf32> to vector<1x16x16xf32>
    tpu.vector_store %arg5[%c3_53, %c0_54, %c0_55], %84 {strides = array<i32>} : memref<4x16x16xf32, #tpu.memory_space<vmem>>, vector<1x16x16xf32>,
    return
  }
  func.func @transform_0(%arg0: i32, %arg1: i32) -> (i32, i32, i32) {
    %c0_i32 = arith.constant 0 : i32
    %c0_i32_0 = arith.constant 0 : i32
    return %arg1, %arg0, %c0_i32 : i32, i32, i32
  }
  func.func @transform_1(%arg0: i32, %arg1: i32) -> (i32, i32) {
    %c0_i32 = arith.constant 0 : i32
    %c0_i32_0 = arith.constant 0 : i32
    %c0_i32_1 = arith.constant 0 : i32
    return %c0_i32, %c0_i32_0 : i32, i32
  }
  func.func @transform_2(%arg0: i32, %arg1: i32) -> (i32, i32) {
    %c0_i32 = arith.constant 0 : i32
    %c0_i32_0 = arith.constant 0 : i32
    %c0_i32_1 = arith.constant 0 : i32
    return %c0_i32, %c0_i32_0 : i32, i32
  }
  func.func @transform_3(%arg0: i32, %arg1: i32) -> (i32, i32, i32) {
    %c0_i32 = arith.constant 0 : i32
    %c0_i32_0 = arith.constant 0 : i32
    return %arg1, %arg0, %c0_i32 : i32, i32, i32
  }
}

</mosaic_0001>

<llo_original>
// kernel: tpu_custom_call.1
$region0: #{tpu_custom_call.1}
  #allocation0 [shape = 'u32[]', space=smem, size = 0x4, offset = 0x4, fixed_abs, tag = 'smem constant byte address 0x4 - core index']
  #allocation1 [shape = 'u32[72,128]{1,0:T(1,128)}', space=vmem, size = 0x9000, scoped, tag = 'internal scratch']
  #allocation2 [shape = 'f32[16,32]{1,0:T(8,128)}', space=vmem, size = 0x2000, scoped, tag = 'scratch operand']
  %s0 = inlined_call_operand.hbm [shape: f32[4,16,32], index: 0, kind: input, shape index: {}]
  %s1 = inlined_call_operand.vmem [shape: f32[32,16], index: 1, kind: input, shape index: {}]
  %s2 = inlined_call_operand.vmem [shape: f32[1,16], index: 2, kind: input, shape index: {}]
  %s3 = inlined_call_operand.hbm [shape: f32[4,16,16], index: 3, kind: output, shape index: {}]
  %s4 = sld [smem:[#allocation0]]
  $region30: #{tpu_custom_call.1} parent=0
    _
  %s6 = ssub.s32 1, %s4
  %s7 = scalar_select 0, %s6, %s4
  $region1: #{tpu_custom_call.1} parent=0
    #allocation3 [shape = 'u8[32768]{0}', space=vmem, size = 0x8000, scoped, tag = 'input window, operand 0, single buffered']
    #allocation4 [shape = 's32[1]{0}', space=sflag, size = 0x4, scoped, tag = 'scoped memory for tpu_custom_call.1']
    #allocation5 [shape = 's32[1]{0}', space=sflag, size = 0x4, scoped, tag = 'scoped memory for tpu_custom_call.1']
    #allocation6 [shape = 'u8[32768]{0}', space=vmem, size = 0x8000, scoped, tag = 'output window, operand 0, single buffered']
    %8 = vsyncpa [#allocation4], 0
    %9 = vsyncpa [#allocation5], 0
    // Predicated region
    $region2: #{tpu_custom_call.1} parent=1 // pred_check
      _
    $region3: #{tpu_custom_call.1} parent=1 // pred_check_branch
      %11 = sbr.rel (0) target = $region5
    $region4: #{tpu_custom_call.1} parent=1 // pred_region
      %13 = vsyncadd [#allocation4], 0
      %s14 = sshll.u32 %s0, 4
      %s15 = int_to_ptr.hbm [resolvable:$true] %s14
      %s16 = sshll.u32 [#allocation3], 4
      %s17 = int_to_ptr.vmem [resolvable:$true] %s16
      %22 = dma.hbm_to_vmem [thread:$0]  %s15, 1024, %s17, [#allocation4], 128, 128, 8
    $region5: #{tpu_custom_call.1} parent=1 // pred_fallthru
      _
    // Predicated region
    $region6: #{tpu_custom_call.1} parent=1 // pred_check
      _
    $region7: #{tpu_custom_call.1} parent=1 // pred_check_branch
      %24 = sbr.rel (0) target = $region9
    $region8: #{tpu_custom_call.1} parent=1 // pred_region
      _
    $region9: #{tpu_custom_call.1} parent=1 // pred_fallthru
      _
    // Predicated region
    $region10: #{tpu_custom_call.1} parent=1 // pred_check
      _
    $region11: #{tpu_custom_call.1} parent=1 // pred_check_branch
      %26 = sbr.rel (0) target = $region13
    $region12: #{tpu_custom_call.1} parent=1 // pred_region
      _
    $region13: #{tpu_custom_call.1} parent=1 // pred_fallthru
      _
    // Predicated region
    $region14: #{tpu_custom_call.1} parent=1 // pred_check
      _
    $region15: #{tpu_custom_call.1} parent=1 // pred_check_branch
      %28 = sbr.rel (0) target = $region17
    $region16: #{tpu_custom_call.1} parent=1 // pred_region
      %30 = dma.done [#allocation4], 1024
    $region17: #{tpu_custom_call.1} parent=1 // pred_fallthru
      _
    %p31 = scmp.eq.s32.totalorder 0, 0
    // Predicated region
    $region18: #{tpu_custom_call.1} parent=1 // pred_check
      %p32 = pneg %p31
    $region19: #{tpu_custom_call.1} parent=1 // pred_check_branch
      %34 = sbr.rel (%p32) target = $region21
    $region20: #{tpu_custom_call.1} parent=1 // pred_region
      %vm35 = vcmask 261120
      %36 = vst.msk [vmem:[#allocation2] sm:$0xff] %vm35, 0.0
      %37 = vst.msk [vmem:[#allocation2 + $0x8] sm:$0xff] %vm35, 0.0
    $region21: #{tpu_custom_call.1} parent=1 // pred_fallthru
      _
    %v38 = vld [vmem:[%s1] sm:$0xff]
    %v39 = vld [vmem:[%s1 + $0x8] sm:$0xff]
    %v40 = vld [vmem:[%s1 + $0x10] sm:$0xff]
    %v41 = vld [vmem:[%s1 + $0x18] sm:$0xff]
    %v42 = vld [vmem:[%s2] sm:$0x1]
    %v43 = vld [vmem:[#allocation3] sm:$0xff]
    %v44 = vld [vmem:[#allocation3 + $0x8] sm:$0xff]
    %v45 = vld [vmem:[#allocation2] sm:$0xff]
    %v46 = vld [vmem:[#allocation2 + $0x8] sm:$0xff]
    %v47 = vsub.f32 %v43, %v45
    %v48 = vsub.f32 %v44, %v46
    %v49 = vmul.f32 %v47, 0.5
    %v50 = vmul.f32 %v48, 0.5
    %v51 = vadd.f32 %v45, %v49
    %v52 = vadd.f32 %v46, %v50
    %vm53 = vcmp.ge.f32.partialorder %v51, 1.0
    %vm54 = vcmp.ge.f32.partialorder %v52, 1.0
    %v55 = vsel %vm53, 1, 0
    %v56 = vsel %vm54, 1, 0
    %v57 = vcvt.s32.f32 %v55
    %v58 = vcvt.s32.f32 %v56
    %v59 = vsel %vm53, 0.0, %v51
    %v60 = vsel %vm54, 0.0, %v52
    %vm61 = vcmask 261120
    %62 = vst.msk [vmem:[#allocation2] sm:$0xff] %vm61, %v59
    %63 = vst.msk [vmem:[#allocation2 + $0x8] sm:$0xff] %vm61, %v60
    %v65 = vperm.slane %v42, 0
    %v68 = vsel %vm61, %v57, 0
    %v71 = vsel %vm61, %v58, 0
    %73 = vmatpush.msra.mxu0 0.0
    %74 = vmatpush.msra.mxu0 0.0
    %75 = vmatpush.msra.mxu0 0.0
    %76 = vmatpush.msra.mxu0 0.0
    %77 = vmatpush.msra.mxu0 0.0
    %78 = vmatpush.msra.mxu0 0.0
    %79 = vmatpush.msra.mxu0 0.0
    %80 = vmatpush.msra.mxu0 0.0
    %81 = vmatpush.msra.mxu0 0.0
    %82 = vmatpush.msra.mxu0 0.0
    %83 = vmatpush.msra.mxu0 0.0
    %84 = vmatpush.msra.mxu0 0.0
    %85 = vmatpush.msra.mxu0 %v41
    %86 = vmatpush.msra.mxu0 %v40
    %87 = vmatpush.msra.mxu0 %v39
    %88 = vmatpush.msra.mxu0 %v38
    %89 = vmatmul.f32.gmra.mxu0 %v68
    %v90 = vpop.f32.mrf.mxu0
    %v91 = vadd.f32 %v65, %v90
    %92 = vmatmul.f32.gmra.mxu0 %v71
    %v93 = vpop.f32.mrf.mxu0
    %v94 = vadd.f32 %v65, %v93
    %95 = vdwg.mxu0
    %vm96 = vcmask 130048
    %97 = vst.msk [vmem:[#allocation6] sm:$0xff] %vm96, %v91
    %98 = vst.msk [vmem:[#allocation6 + $0x8] sm:$0xff] %vm96, %v94
    %s99 = scalar_lea.vmem [#allocation3], 16
    %v100 = vld [vmem:[%s99] sm:$0xff]
    %v101 = vld [vmem:[%s99 + $0x8] sm:$0xff]
    %v102 = vld [vmem:[#allocation2] sm:$0xff]
    %v103 = vld [vmem:[#allocation2 + $0x8] sm:$0xff]
    %v104 = vsub.f32 %v100, %v102
    %v105 = vsub.f32 %v101, %v103
    %v106 = vmul.f32 %v104, 0.5
    %v107 = vmul.f32 %v105, 0.5
    %v108 = vadd.f32 %v102, %v106
    %v109 = vadd.f32 %v103, %v107
    %vm110 = vcmp.ge.f32.partialorder %v108, 1.0
    %vm111 = vcmp.ge.f32.partialorder %v109, 1.0
    %v112 = vsel %vm110, 1, 0
    %v113 = vsel %vm111, 1, 0
    %v114 = vcvt.s32.f32 %v112
    %v115 = vcvt.s32.f32 %v113
    %v116 = vsel %vm110, 0.0, %v108
    %v117 = vsel %vm111, 0.0, %v109
    %118 = vst.msk [vmem:[#allocation2] sm:$0xff] %vm61, %v116
    %119 = vst.msk [vmem:[#allocation2 + $0x8] sm:$0xff] %vm61, %v117
    %v121 = vsel %vm61, %v114, 0
    %v124 = vsel %vm61, %v115, 0
    %126 = vmatpush.msra.mxu0 0.0
    %127 = vmatpush.msra.mxu0 0.0
    %128 = vmatpush.msra.mxu0 0.0
    %129 = vmatpush.msra.mxu0 0.0
    %130 = vmatpush.msra.mxu0 0.0
    %131 = vmatpush.msra.mxu0 0.0
    %132 = vmatpush.msra.mxu0 0.0
    %133 = vmatpush.msra.mxu0 0.0
    %134 = vmatpush.msra.mxu0 0.0
    %135 = vmatpush.msra.mxu0 0.0
    %136 = vmatpush.msra.mxu0 0.0
    %137 = vmatpush.msra.mxu0 0.0
    %138 = vmatpush.msra.mxu0 %v41
    %139 = vmatpush.msra.mxu0 %v40
    %140 = vmatpush.msra.mxu0 %v39
    %141 = vmatpush.msra.mxu0 %v38
    %142 = vmatmul.f32.gmra.mxu0 %v121
    %v143 = vpop.f32.mrf.mxu0
    %v144 = vadd.f32 %v65, %v143
    %145 = vmatmul.f32.gmra.mxu0 %v124
    %v146 = vpop.f32.mrf.mxu0
    %v147 = vadd.f32 %v65, %v146
    %148 = vdwg.mxu0
    %s149 = scalar_lea.vmem [#allocation6], 16
    %150 = vst.msk [vmem:[%s149] sm:$0xff] %vm96, %v144
    %151 = vst.msk [vmem:[%s149 + $0x8] sm:$0xff] %vm96, %v147
    %s152 = scalar_lea.vmem [#allocation3], 32
    %v153 = vld [vmem:[%s152] sm:$0xff]
    %v154 = vld [vmem:[%s152 + $0x8] sm:$0xff]
    %v155 = vld [vmem:[#allocation2] sm:$0xff]
    %v156 = vld [vmem:[#allocation2 + $0x8] sm:$0xff]
    %v157 = vsub.f32 %v153, %v155
    %v158 = vsub.f32 %v154, %v156
    %v159 = vmul.f32 %v157, 0.5
    %v160 = vmul.f32 %v158, 0.5
    %v161 = vadd.f32 %v155, %v159
    %v162 = vadd.f32 %v156, %v160
    %vm163 = vcmp.ge.f32.partialorder %v161, 1.0
    %vm164 = vcmp.ge.f32.partialorder %v162, 1.0
    %v165 = vsel %vm163, 1, 0
    %v166 = vsel %vm164, 1, 0
    %v167 = vcvt.s32.f32 %v165
    %v168 = vcvt.s32.f32 %v166
    %v169 = vsel %vm163, 0.0, %v161
    %v170 = vsel %vm164, 0.0, %v162
    %171 = vst.msk [vmem:[#allocation2] sm:$0xff] %vm61, %v169
    %172 = vst.msk [vmem:[#allocation2 + $0x8] sm:$0xff] %vm61, %v170
    %v174 = vsel %vm61, %v167, 0
    %v177 = vsel %vm61, %v168, 0
    %179 = vmatpush.msra.mxu0 0.0
    %180 = vmatpush.msra.mxu0 0.0
    %181 = vmatpush.msra.mxu0 0.0
    %182 = vmatpush.msra.mxu0 0.0
    %183 = vmatpush.msra.mxu0 0.0
    %184 = vmatpush.msra.mxu0 0.0
    %185 = vmatpush.msra.mxu0 0.0
    %186 = vmatpush.msra.mxu0 0.0
    %187 = vmatpush.msra.mxu0 0.0
    %188 = vmatpush.msra.mxu0 0.0
    %189 = vmatpush.msra.mxu0 0.0
    %190 = vmatpush.msra.mxu0 0.0
    %191 = vmatpush.msra.mxu0 %v41
    %192 = vmatpush.msra.mxu0 %v40
    %193 = vmatpush.msra.mxu0 %v39
    %194 = vmatpush.msra.mxu0 %v38
    %195 = vmatmul.f32.gmra.mxu0 %v174
    %v196 = vpop.f32.mrf.mxu0
    %v197 = vadd.f32 %v65, %v196
    %198 = vmatmul.f32.gmra.mxu0 %v177
    %v199 = vpop.f32.mrf.mxu0
    %v200 = vadd.f32 %v65, %v199
    %201 = vdwg.mxu0
    %s202 = scalar_lea.vmem [#allocation6], 32
    %203 = vst.msk [vmem:[%s202] sm:$0xff] %vm96, %v197
    %204 = vst.msk [vmem:[%s202 + $0x8] sm:$0xff] %vm96, %v200
    %s205 = scalar_lea.vmem [#allocation3], 48
    %v206 = vld [vmem:[%s205] sm:$0xff]
    %v207 = vld [vmem:[%s205 + $0x8] sm:$0xff]
    %v208 = vld [vmem:[#allocation2] sm:$0xff]
    %v209 = vld [vmem:[#allocation2 + $0x8] sm:$0xff]
    %v210 = vsub.f32 %v206, %v208
    %v211 = vsub.f32 %v207, %v209
    %v212 = vmul.f32 %v210, 0.5
    %v213 = vmul.f32 %v211, 0.5
    %v214 = vadd.f32 %v208, %v212
    %v215 = vadd.f32 %v209, %v213
    %vm216 = vcmp.ge.f32.partialorder %v214, 1.0
    %vm217 = vcmp.ge.f32.partialorder %v215, 1.0
    %v218 = vsel %vm216, 1, 0
    %v219 = vsel %vm217, 1, 0
    %v220 = vcvt.s32.f32 %v218
    %v221 = vcvt.s32.f32 %v219
    %v222 = vsel %vm216, 0.0, %v214
    %v223 = vsel %vm217, 0.0, %v215
    %224 = vst.msk [vmem:[#allocation2] sm:$0xff] %vm61, %v222
    %225 = vst.msk [vmem:[#allocation2 + $0x8] sm:$0xff] %vm61, %v223
    %v227 = vsel %vm61, %v220, 0
    %v230 = vsel %vm61, %v221, 0
    %232 = vmatpush.msra.mxu0 0.0
    %233 = vmatpush.msra.mxu0 0.0
    %234 = vmatpush.msra.mxu0 0.0
    %235 = vmatpush.msra.mxu0 0.0
    %236 = vmatpush.msra.mxu0 0.0
    %237 = vmatpush.msra.mxu0 0.0
    %238 = vmatpush.msra.mxu0 0.0
    %239 = vmatpush.msra.mxu0 0.0
    %240 = vmatpush.msra.mxu0 0.0
    %241 = vmatpush.msra.mxu0 0.0
    %242 = vmatpush.msra.mxu0 0.0
    %243 = vmatpush.msra.mxu0 0.0
    %244 = vmatpush.msra.mxu0 %v41
    %245 = vmatpush.msra.mxu0 %v40
    %246 = vmatpush.msra.mxu0 %v39
    %247 = vmatpush.msra.mxu0 %v38
    %248 = vmatmul.f32.gmra.mxu0 %v227
    %v249 = vpop.f32.mrf.mxu0
    %v250 = vadd.f32 %v65, %v249
    %251 = vmatmul.f32.gmra.mxu0 %v230
    %v252 = vpop.f32.mrf.mxu0
    %v253 = vadd.f32 %v65, %v252
    %254 = vdwg.mxu0
    %s255 = scalar_lea.vmem [#allocation6], 48
    %256 = vst.msk [vmem:[%s255] sm:$0xff] %vm96, %v250
    %257 = vst.msk [vmem:[%s255 + $0x8] sm:$0xff] %vm96, %v253
    // Predicated region
    $region22: #{tpu_custom_call.1} parent=1 // pred_check
      _
    $region23: #{tpu_custom_call.1} parent=1 // pred_check_branch
      %259 = sbr.rel (0) target = $region25
    $region24: #{tpu_custom_call.1} parent=1 // pred_region
      %261 = vsyncadd [#allocation5], 0
      %s262 = sshll.u32 [#allocation6], 4
      %s263 = int_to_ptr.vmem [resolvable:$true] %s262
      %s264 = sshll.u32 %s3, 4
      %s265 = int_to_ptr.hbm [resolvable:$true] %s264
      %270 = dma.vmem_to_hbm [thread:$0]  %s263, 1024, %s265, [#allocation5], 128, 128, 8
    $region25: #{tpu_custom_call.1} parent=1 // pred_fallthru
      _
    // Predicated region
    $region26: #{tpu_custom_call.1} parent=1 // pred_check
      _
    $region27: #{tpu_custom_call.1} parent=1 // pred_check_branch
      %272 = sbr.rel (0) target = $region29
    $region28: #{tpu_custom_call.1} parent=1 // pred_region
      %274 = dma.done [#allocation5], 1024
    $region29: #{tpu_custom_call.1} parent=1 // pred_fallthru
      _
    %275 = vsyncpa [#allocation4], 1
    %276 = vsyncpa [#allocation5], 1

</llo_original>
